<compile_context>
chip_gen: v7x
topology: tpu7x:2x2x1
jax: 0.10.0
libtpu: 0.0.40
codegen_flags: <defaults>
</compile_context>

<pallas_src>
import functools

import jax
import jax.numpy as jnp
from jax.experimental import pallas as pl
from jax.experimental.pallas import tpu as pltpu


def _round_up(x, m):
    return (x + m - 1) // m * m


def _pad2d(a, rows, cols):
    pr, pc = rows - a.shape[0], cols - a.shape[1]
    if pr or pc:
        a = jnp.pad(a, ((0, pr), (0, pc)))
    return a


def _ffn_block_kernel(x_ref, g_ref, w13_ref, w2_ref, o_ref, xn_ref, acc_ref,
                      *, hidden, eps, tf):
    # x_ref: (tm, Hp)   g_ref: (1, Hp)   w13_ref: (Hp, 2*tf)   w2_ref: (tf, Hp)
    # o_ref: (tm, Hp)   xn_ref: (tm, Hp) scratch   acc_ref: (tm, Hp) f32 scratch
    f = pl.program_id(1)

    @pl.when(f == 0)
    def _init():
        # RMSNorm in f32 (mean over the *true* hidden dim; padded lanes are 0).
        x = x_ref[...].astype(jnp.float32)
        ms = jnp.sum(x * x, axis=-1, keepdims=True) * (1.0 / float(hidden))
        xn = x * jax.lax.rsqrt(ms + eps) * g_ref[...].astype(jnp.float32)
        xn_ref[...] = xn.astype(xn_ref.dtype)          # stored in native dtype for the MXU
        acc_ref[...] = jnp.zeros_like(acc_ref)

    # Single fused gate/up matmul: native-dtype operands, f32 accumulator.
    h13 = jnp.dot(xn_ref[...], w13_ref[...],
                  preferred_element_type=jnp.float32)   # (tm, 2*tf)
    h1 = h13[:, :tf]
    h3 = h13[:, tf:]

    # SiLU(h1) * h3 in f32 on the VPU/EUP.
    gated = (h1 * jax.nn.sigmoid(h1)) * h3              # (tm, tf) f32

    # Down-projection partial sum; cast gated back to the weight dtype (bf16 path).
    acc_ref[...] += jnp.dot(gated.astype(w2_ref.dtype), w2_ref[...],
                            preferred_element_type=jnp.float32)

    @pl.when(f == pl.num_programs(1) - 1)
    def _finalize():
        o_ref[...] = acc_ref[...].astype(o_ref.dtype)


@functools.partial(jax.jit,
                   static_argnames=("eps", "tm", "tf", "vmem_limit_bytes"))
def ffn_block_pallas(x, gamma, w1_t, w3_t, w2_t, *, eps=1e-5, tm=None, tf=None,
                     vmem_limit_bytes=None):
    """x: (B, S, H).  gamma: (H,).  w1_t/w3_t: (H, F).  w2_t: (F, H).

    Weights are the transposed nn.Linear weights (stored (in, out))."""
    B, S, H = x.shape
    F = w1_t.shape[1]
    assert w3_t.shape == (H, F) and w2_t.shape == (F, H) and gamma.shape == (H,)
    M = B * S

    # ---- tile selection -----------------------------------------------------
    Hp = _round_up(H, 128)                     # lane-dense hidden dim
    if tm is None:
        tm = 256 if M >= 256 else _round_up(M, 16)
    Mp = _round_up(M, tm)
    if tf is None:
        tf = F if F <= 2048 else 1024          # stream F only when weights are big
    Fp = _round_up(F, tf)
    nf = Fp // tf

    # ---- padded / fused operands (zero padding is exact: contributes 0) -----
    x2d = _pad2d(x.reshape(M, H), Mp, Hp)
    g2d = _pad2d(gamma.reshape(1, H), 1, Hp)
    w1p = _pad2d(w1_t, Hp, Fp)
    w3p = _pad2d(w3_t, Hp, Fp)
    w2p = _pad2d(w2_t, Fp, Hp)
    # Interleave per F-tile so block f of w13 = [W1 tile f | W3 tile f].
    # (In production this packing would be done once at weight-load time.)
    w13 = jnp.concatenate(
        [w1p.reshape(Hp, nf, tf), w3p.reshape(Hp, nf, tf)], axis=2
    ).reshape(Hp, 2 * Fp)

    # ---- compiler params ----------------------------------------------------
    xb = x.dtype.itemsize
    wb = w1_t.dtype.itemsize
    est_vmem = (2 * tm * Hp * xb           # x tiles, double-buffered
                + 2 * tm * Hp * xb         # out tiles, double-buffered
                + 2 * Hp * 2 * tf * wb     # w13 tiles, double-buffered
                + 2 * tf * Hp * wb         # w2 tiles, double-buffered
                + tm * Hp * (4 + xb)       # acc + xn scratch
                + 2 * Hp * gamma.dtype.itemsize)
    if vmem_limit_bytes is None and est_vmem > 24 * 1024 * 1024:
        # Raise the scoped VMEM limit (default 16/32 MiB) when tile residency
        # needs it; stay below v7x's 64 MiB physical VMEM.
        vmem_limit_bytes = min(int(est_vmem * 1.25), 60 * 1024 * 1024)
    cp = dict(dimension_semantics=("parallel", "arbitrary"))
    if vmem_limit_bytes is not None:
        cp["vmem_limit_bytes"] = int(vmem_limit_bytes)

    kernel = functools.partial(_ffn_block_kernel,
                               hidden=H, eps=float(eps), tf=tf)

    out2d = pl.pallas_call(
        kernel,
        out_shape=jax.ShapeDtypeStruct((Mp, Hp), x.dtype),
        grid_spec=pltpu.PrefetchScalarGridSpec(
            num_scalar_prefetch=0,
            grid=(Mp // tm, nf),
            in_specs=[
                pl.BlockSpec((tm, Hp), lambda i, f: (i, 0)),       # x tile
                pl.BlockSpec((1, Hp), lambda i, f: (0, 0)),        # gamma
                pl.BlockSpec((Hp, 2 * tf), lambda i, f: (0, f)),   # fused W1|W3 tile
                pl.BlockSpec((tf, Hp), lambda i, f: (f, 0)),       # W2 tile
            ],
            out_specs=pl.BlockSpec((tm, Hp), lambda i, f: (i, 0)),
            scratch_shapes=[
                pltpu.VMEM((tm, Hp), x.dtype),       # normalized x (reused over f)
                pltpu.VMEM((tm, Hp), jnp.float32),   # f32 output accumulator
            ],
        ),
        compiler_params=pltpu.CompilerParams(**cp),
        cost_estimate=pl.CostEstimate(
            flops=6 * M * H * F,
            transcendentals=M * F,
            bytes_accessed=2 * M * H * xb + 3 * H * F * wb,
        ),
    )(x2d, g2d, w13, w2p)

    return out2d[:M, :H].reshape(B, S, H)


def block_tail_reference(x, gamma, w1_t, w3_t, w2_t, eps=1e-5):
    """Pure-JAX reference for ffn(rms_norm(x))."""
    xf = x.astype(jnp.float32)
    ms = jnp.mean(xf * xf, axis=-1, keepdims=True)
    xn = xf * jax.lax.rsqrt(ms + eps) * gamma.astype(jnp.float32)
    h1 = xn @ w1_t.astype(jnp.float32)
    h3 = xn @ w3_t.astype(jnp.float32)
    return (jax.nn.silu(h1) * h3) @ w2_t.astype(jnp.float32)


if __name__ == "__main__":
    # Small shapes consistent with the module: hidden=32, ffn_multiplier=4.
    batch, seq, hidden, ffn_mult = 2, 8, 32, 4
    ffn_dim = ffn_mult * hidden
    eps = 1e-5

    key = jax.random.PRNGKey(0)
    kx, k1, k2, k3, kg = jax.random.split(key, 5)

    x = jax.random.normal(kx, (batch, seq, hidden), dtype=jnp.float32)

    # nn.Linear weights are (out, in); we store the transposed (in, out) form.
    def init_linear_t(k, in_dim, out_dim):
        bound = 1.0 / (in_dim ** 0.5)
        return jax.random.uniform(k, (in_dim, out_dim), jnp.float32,
                                  minval=-bound, maxval=bound)

    w1_t = init_linear_t(k1, hidden, ffn_dim)    # w1: (ffn, hidden) transposed
    w3_t = init_linear_t(k3, hidden, ffn_dim)    # w3: (ffn, hidden) transposed
    w2_t = init_linear_t(k2, ffn_dim, hidden)    # w2: (hidden, ffn) transposed
    gamma = 1.0 + 0.1 * jax.random.normal(kg, (hidden,), dtype=jnp.float32)

    ref = block_tail_reference(x, gamma, w1_t, w3_t, w2_t, eps)

    # 1) Default tiling (single F step -> resident weights).
    out = ffn_block_pallas(x, gamma, w1_t, w3_t, w2_t, eps=eps)
    out = jax.block_until_ready(out)
    assert out.shape == (batch, seq, hidden)
    assert jnp.allclose(out, ref, atol=1e-4, rtol=1e-4), "f32 default mismatch"

    # 2) Multi-step grid (2 M tiles x 2 F tiles) exercising the accumulator path.
    out2 = ffn_block_pallas(x, gamma, w1_t, w3_t, w2_t, eps=eps, tm=8, tf=64)
    out2 = jax.block_until_ready(out2)
    assert jnp.allclose(out2, ref, atol=1e-4, rtol=1e-4), "tiled f32 mismatch"

    # 3) bf16 path: native bf16 operands on the MXU, f32 accumulation.
    out_bf = ffn_block_pallas(x.astype(jnp.bfloat16),
                              gamma.astype(jnp.bfloat16),
                              w1_t.astype(jnp.bfloat16),
                              w3_t.astype(jnp.bfloat16),
                              w2_t.astype(jnp.bfloat16),
                              eps=eps, tm=16, tf=64)
    out_bf = jax.block_until_ready(out_bf)
    assert out_bf.shape == (batch, seq, hidden)
    assert jnp.allclose(out_bf.astype(jnp.float32), ref, atol=5e-2, rtol=5e-2), \
        "bf16 mismatch"

    print("KERNEL_OK")
</pallas_src>

<mosaic_0001>
module attributes {stable_mosaic.version = 11 : i64} {
  func.func @_ffn_block_kernel(%arg0: i32, %arg1: i32, %arg2: memref<16x128xf32, #tpu.memory_space<vmem>>, %arg3: memref<1x128xf32, #tpu.memory_space<vmem>>, %arg4: memref<128x256xf32, #tpu.memory_space<vmem>>, %arg5: memref<128x128xf32, #tpu.memory_space<vmem>>, %arg6: memref<16x128xf32, #tpu.memory_space<vmem>>, %arg7: memref<16x128xf32, #tpu.memory_space<vmem>>, %arg8: memref<16x128xf32, #tpu.memory_space<vmem>>) attributes {dimension_semantics = [#tpu.dimension_semantics<parallel>, #tpu.dimension_semantics<arbitrary>], iteration_bounds = array<i64: 1, 1>, scalar_prefetch = 0 : i64, scratch_operands = 2 : i64, tpu.core_type = #tpu.core_type<tc>, window_params = [{transform_indices = @transform_0, window_bounds = array<i64: 16, 128>}, {pipeline_mode = #tpu.pipeline_mode<synchronous>, transform_indices = @transform_1, window_bounds = array<i64: 1, 128>}, {transform_indices = @transform_2, window_bounds = array<i64: 128, 256>}, {transform_indices = @transform_3, window_bounds = array<i64: 128, 128>}, {transform_indices = @transform_4, window_bounds = array<i64: 16, 128>}]} {
    %c0_i32 = arith.constant 0 : i32
    %0 = arith.cmpi eq, %arg1, %c0_i32 : i32
    %1 = arith.extui %0 : i1 to i32
    %c0_i32_0 = arith.constant 0 : i32
    %2 = arith.cmpi ne, %1, %c0_i32_0 : i32
    scf.if %2 {
      %c0_14 = arith.constant 0 : index
      %c0_15 = arith.constant 0 : index
      %23 = vector.load %arg2[%c0_14, %c0_15] : memref<16x128xf32, #tpu.memory_space<vmem>>, vector<16x128xf32>
      %24 = arith.mulf %23, %23 : vector<16x128xf32>
      %cst_16 = arith.constant dense<0.000000e+00> : vector<16xf32>
      %25 = vector.multi_reduction <add>, %24, %cst_16 [1] : vector<16x128xf32> to vector<16xf32>
      %26 = vector.shape_cast %25 : vector<16xf32> to vector<16x1xf32>
      %cst_17 = arith.constant 3.125000e-02 : f32
      %27 = vector.broadcast %cst_17 : f32 to vector<16x1xf32>
      %28 = arith.mulf %26, %27 : vector<16x1xf32>
      %cst_18 = arith.constant 9.99999974E-6 : f32
      %29 = vector.broadcast %cst_18 : f32 to vector<16x1xf32>
      %30 = arith.addf %28, %29 : vector<16x1xf32>
      %31 = math.rsqrt %30 : vector<16x1xf32>
      %32 = vector.broadcast %31 : vector<16x1xf32> to vector<16x128xf32>
      %33 = arith.mulf %23, %32 : vector<16x128xf32>
      %c0_19 = arith.constant 0 : index
      %c0_20 = arith.constant 0 : index
      %34 = vector.load %arg3[%c0_19, %c0_20] : memref<1x128xf32, #tpu.memory_space<vmem>>, vector<1x128xf32>
      %35 = vector.broadcast %34 : vector<1x128xf32> to vector<16x128xf32>
      %36 = arith.mulf %33, %35 : vector<16x128xf32>
      %c0_21 = arith.constant 0 : index
      %c0_22 = arith.constant 0 : index
      %37 = vector.load %arg7[%c0_21, %c0_22] : memref<16x128xf32, #tpu.memory_space<vmem>>, vector<16x128xf32>
      tpu.vector_store %arg7[%c0_21, %c0_22], %36 {strides = array<i32>} : memref<16x128xf32, #tpu.memory_space<vmem>>, vector<16x128xf32>,
      %cst_23 = arith.constant 0.000000e+00 : f32
      %38 = vector.broadcast %cst_23 : f32 to vector<16x128xf32>
      %c0_24 = arith.constant 0 : index
      %c0_25 = arith.constant 0 : index
      %39 = vector.load %arg8[%c0_24, %c0_25] : memref<16x128xf32, #tpu.memory_space<vmem>>, vector<16x128xf32>
      tpu.vector_store %arg8[%c0_24, %c0_25], %38 {strides = array<i32>} : memref<16x128xf32, #tpu.memory_space<vmem>>, vector<16x128xf32>,
    } else {
    }
    %c0 = arith.constant 0 : index
    %c0_1 = arith.constant 0 : index
    %3 = vector.load %arg7[%c0, %c0_1] : memref<16x128xf32, #tpu.memory_space<vmem>>, vector<16x128xf32>
    %c0_2 = arith.constant 0 : index
    %c0_3 = arith.constant 0 : index
    %4 = vector.load %arg4[%c0_2, %c0_3] : memref<128x256xf32, #tpu.memory_space<vmem>>, vector<128x256xf32>
    %cst = arith.constant dense<0.000000e+00> : vector<16x256xf32>
    %5 = tpu.matmul %3, %4, %cst {dimension_numbers = #tpu.dot_dimension_numbers<[1], [0], [0], [1], [0, 0, 1, 1], [], []>} : vector<16x128xf32>, vector<128x256xf32>, vector<16x256xf32> -> vector<16x256xf32>
    %6 = vector.extract_strided_slice %5 {offsets = [0, 0], sizes = [16, 128], strides = [1, 1]} : vector<16x256xf32> to vector<16x128xf32>
    %7 = vector.extract_strided_slice %5 {offsets = [0, 128], sizes = [16, 128], strides = [1, 1]} : vector<16x256xf32> to vector<16x128xf32>
    %8 = arith.negf %6 : vector<16x128xf32>
    %9 = math.exp %8 : vector<16x128xf32>
    %cst_4 = arith.constant 1.000000e+00 : f32
    %10 = vector.broadcast %cst_4 : f32 to vector<16x128xf32>
    %11 = arith.addf %10, %9 : vector<16x128xf32>
    %12 = arith.divf %10, %11 : vector<16x128xf32>
    %13 = arith.mulf %6, %12 : vector<16x128xf32>
    %14 = arith.mulf %13, %7 : vector<16x128xf32>
    %c0_5 = arith.constant 0 : index
    %c0_6 = arith.constant 0 : index
    %15 = vector.load %arg8[%c0_5, %c0_6] : memref<16x128xf32, #tpu.memory_space<vmem>>, vector<16x128xf32>
    %c0_7 = arith.constant 0 : index
    %c0_8 = arith.constant 0 : index
    %16 = vector.load %arg5[%c0_7, %c0_8] : memref<128x128xf32, #tpu.memory_space<vmem>>, vector<128x128xf32>
    %cst_9 = arith.constant dense<0.000000e+00> : vector<16x128xf32>
    %17 = tpu.matmul %14, %16, %cst_9 {dimension_numbers = #tpu.dot_dimension_numbers<[1], [0], [0], [1], [0, 0, 1, 1], [], []>} : vector<16x128xf32>, vector<128x128xf32>, vector<16x128xf32> -> vector<16x128xf32>
    %18 = arith.addf %15, %17 : vector<16x128xf32>
    %c0_10 = arith.constant 0 : index
    %c0_11 = arith.constant 0 : index
    %19 = vector.load %arg8[%c0_10, %c0_11] : memref<16x128xf32, #tpu.memory_space<vmem>>, vector<16x128xf32>
    tpu.vector_store %arg8[%c0_10, %c0_11], %18 {strides = array<i32>} : memref<16x128xf32, #tpu.memory_space<vmem>>, vector<16x128xf32>,
    %c0_i32_12 = arith.constant 0 : i32
    %20 = arith.cmpi eq, %arg1, %c0_i32_12 : i32
    %21 = arith.extui %20 : i1 to i32
    %c0_i32_13 = arith.constant 0 : i32
    %22 = arith.cmpi ne, %21, %c0_i32_13 : i32
    scf.if %22 {
      %c0_14 = arith.constant 0 : index
      %c0_15 = arith.constant 0 : index
      %23 = vector.load %arg8[%c0_14, %c0_15] : memref<16x128xf32, #tpu.memory_space<vmem>>, vector<16x128xf32>
      %c0_16 = arith.constant 0 : index
      %c0_17 = arith.constant 0 : index
      %24 = vector.load %arg6[%c0_16, %c0_17] : memref<16x128xf32, #tpu.memory_space<vmem>>, vector<16x128xf32>
      tpu.vector_store %arg6[%c0_16, %c0_17], %23 {strides = array<i32>} : memref<16x128xf32, #tpu.memory_space<vmem>>, vector<16x128xf32>,
    } else {
    }
    return
  }
  func.func @transform_0(%arg0: i32, %arg1: i32) -> (i32, i32) {
    %c0_i32 = arith.constant 0 : i32
    %c0_i32_0 = arith.constant 0 : i32
    return %arg0, %c0_i32 : i32, i32
  }
  func.func @transform_1(%arg0: i32, %arg1: i32) -> (i32, i32) {
    %c0_i32 = arith.constant 0 : i32
    %c0_i32_0 = arith.constant 0 : i32
    %c0_i32_1 = arith.constant 0 : i32
    return %c0_i32, %c0_i32_0 : i32, i32
  }
  func.func @transform_2(%arg0: i32, %arg1: i32) -> (i32, i32) {
    %c0_i32 = arith.constant 0 : i32
    %c0_i32_0 = arith.constant 0 : i32
    return %c0_i32, %arg1 : i32, i32
  }
  func.func @transform_3(%arg0: i32, %arg1: i32) -> (i32, i32) {
    %c0_i32 = arith.constant 0 : i32
    %c0_i32_0 = arith.constant 0 : i32
    return %arg1, %c0_i32 : i32, i32
  }
  func.func @transform_4(%arg0: i32, %arg1: i32) -> (i32, i32) {
    %c0_i32 = arith.constant 0 : i32
    %c0_i32_0 = arith.constant 0 : i32
    return %arg0, %c0_i32 : i32, i32
  }
}

</mosaic_0001>

<llo_original>
// kernel: ffn_block_pallas.1
$region0: #{ffn_block_pallas.1}
  #allocation0 [shape = 'u32[]', space=smem, size = 0x4, offset = 0x4, fixed_abs, tag = 'smem constant byte address 0x4 - core index']
  #allocation1 [shape = 'u32[144,128]{1,0:T(1,128)}', space=vmem, size = 0x12000, scoped, tag = 'internal scratch']
  #allocation2 [shape = 'f32[16,128]{1,0:T(8,128)}', space=vmem, size = 0x2000, scoped, tag = 'scratch operand']
  #allocation3 [shape = 'f32[16,128]{1,0:T(8,128)}', space=vmem, size = 0x2000, scoped, tag = 'scratch operand']
  %s0 = inlined_call_operand.vmem [shape: f32[16,128], index: 0, kind: input, shape index: {}]
  %s1 = inlined_call_operand.vmem [shape: f32[1,128], index: 1, kind: input, shape index: {}]
  %s2 = inlined_call_operand.vmem [shape: f32[128,256], index: 2, kind: input, shape index: {}]
  %s3 = inlined_call_operand.vmem [shape: f32[128,128], index: 3, kind: input, shape index: {}]
  %s4 = inlined_call_operand.vmem [shape: f32[16,128], index: 4, kind: output, shape index: {}]
  %s5 = sld [smem:[#allocation0]]
  $region34: #{ffn_block_pallas.1} parent=0
    _
  %s7 = ssub.s32 1, %s5
  %s8 = scalar_select 0, %s7, %s5
  // Predicated region
  $region2: #{ffn_block_pallas.1} parent=0 // pred_check
    _
  $region3: #{ffn_block_pallas.1} parent=0 // pred_check_branch
    %10 = sbr.rel (0) target = $region5
  $region4: #{ffn_block_pallas.1} parent=0 // pred_region
    _
  $region5: #{ffn_block_pallas.1} parent=0 // pred_fallthru
    _
  // Predicated region
  $region6: #{ffn_block_pallas.1} parent=0 // pred_check
    _
  $region7: #{ffn_block_pallas.1} parent=0 // pred_check_branch
    %12 = sbr.rel (0) target = $region9
  $region8: #{ffn_block_pallas.1} parent=0 // pred_region
    _
  $region9: #{ffn_block_pallas.1} parent=0 // pred_fallthru
    _
  // Predicated region
  $region10: #{ffn_block_pallas.1} parent=0 // pred_check
    _
  $region11: #{ffn_block_pallas.1} parent=0 // pred_check_branch
    %14 = sbr.rel (0) target = $region13
  $region12: #{ffn_block_pallas.1} parent=0 // pred_region
    _
  $region13: #{ffn_block_pallas.1} parent=0 // pred_fallthru
    _
  // Predicated region
  $region14: #{ffn_block_pallas.1} parent=0 // pred_check
    _
  $region15: #{ffn_block_pallas.1} parent=0 // pred_check_branch
    %16 = sbr.rel (0) target = $region17
  $region16: #{ffn_block_pallas.1} parent=0 // pred_region
    _
  $region17: #{ffn_block_pallas.1} parent=0 // pred_fallthru
    _
  %p17 = scmp.eq.s32.totalorder 0, 0
  // Predicated region
  $region18: #{ffn_block_pallas.1} parent=0 // pred_check
    %p18 = pneg %p17
  $region19: #{ffn_block_pallas.1} parent=0 // pred_check_branch
    %20 = sbr.rel (%p18) target = $region21
  $region20: #{ffn_block_pallas.1} parent=0 // pred_region
    %v21 = vld [vmem:[%s0] sm:$0xff]
    %v22 = vld [vmem:[%s0 + $0x8] sm:$0xff]
    %v23 = vmul.f32 %v21, %v21
    %v24 = vmul.f32 %v22, %v22
    %25 = vadd.xlane.f32.xlu0 %v23
    %v26 = vpop.xlane.xlu0 %25
    %27 = vadd.xlane.f32.xlu0 %v24
    %v28 = vpop.xlane.xlu0 %27
    %v29 = vmul.f32 %v26, 0.03125
    %v30 = vmul.f32 %v28, 0.03125
    %v31 = vadd.f32 %v29, 1e-05
    %v32 = vadd.f32 %v30, 1e-05
    %v33 = vrsqrt.pop %v31
    %v34 = vrsqrt.pop %v32
    %v35 = vmul.f32 %v21, %v33
    %v36 = vmul.f32 %v22, %v34
    %v37 = vld [vmem:[%s1] sm:$0x1]
    %v39 = vlaneseq
    %v40 = vshrl.u32 %v39, 7
    %v41 = vsub.s32 0, %v40
    %v42 = vrot.slane %v37, %v41
    %v44 = vmul.f32 %v35, %v42
    %v45 = vmul.f32 %v36, %v42
    %46 = vst [vmem:[#allocation2] sm:$0xff] %v44
    %47 = vst [vmem:[#allocation2 + $0x8] sm:$0xff] %v45
    %48 = vst [vmem:[#allocation3] sm:$0xff] 0.0
    %49 = vst [vmem:[#allocation3 + $0x8] sm:$0xff] 0.0
  $region21: #{ffn_block_pallas.1} parent=0 // pred_fallthru
    _
  %v50 = vld [vmem:[#allocation2] sm:$0xff]
  %v51 = vld [vmem:[#allocation2 + $0x8] sm:$0xff]
  %v52 = vld [vmem:[%s2] sm:$0xff]
  %v53 = vld [vmem:[%s2 + $0x8] sm:$0xff]
  %v54 = vld [vmem:[%s2 + $0x10] sm:$0xff]
  %v55 = vld [vmem:[%s2 + $0x18] sm:$0xff]
  %v56 = vld [vmem:[%s2 + $0x20] sm:$0xff]
  %v57 = vld [vmem:[%s2 + $0x28] sm:$0xff]
  %v58 = vld [vmem:[%s2 + $0x30] sm:$0xff]
  %v59 = vld [vmem:[%s2 + $0x38] sm:$0xff]
  %v60 = vld [vmem:[%s2 + $0x40] sm:$0xff]
  %v61 = vld [vmem:[%s2 + $0x48] sm:$0xff]
  %v62 = vld [vmem:[%s2 + $0x50] sm:$0xff]
  %v63 = vld [vmem:[%s2 + $0x58] sm:$0xff]
  %v64 = vld [vmem:[%s2 + $0x60] sm:$0xff]
  %v65 = vld [vmem:[%s2 + $0x68] sm:$0xff]
  %v66 = vld [vmem:[%s2 + $0x70] sm:$0xff]
  %v67 = vld [vmem:[%s2 + $0x78] sm:$0xff]
  %v68 = vld [vmem:[%s2 + $0x80] sm:$0xff]
  %v69 = vld [vmem:[%s2 + $0x88] sm:$0xff]
  %v70 = vld [vmem:[%s2 + $0x90] sm:$0xff]
  %v71 = vld [vmem:[%s2 + $0x98] sm:$0xff]
  %v72 = vld [vmem:[%s2 + $0xa0] sm:$0xff]
  %v73 = vld [vmem:[%s2 + $0xa8] sm:$0xff]
  %v74 = vld [vmem:[%s2 + $0xb0] sm:$0xff]
  %v75 = vld [vmem:[%s2 + $0xb8] sm:$0xff]
  %v76 = vld [vmem:[%s2 + $0xc0] sm:$0xff]
  %v77 = vld [vmem:[%s2 + $0xc8] sm:$0xff]
  %v78 = vld [vmem:[%s2 + $0xd0] sm:$0xff]
  %v79 = vld [vmem:[%s2 + $0xd8] sm:$0xff]
  %v80 = vld [vmem:[%s2 + $0xe0] sm:$0xff]
  %v81 = vld [vmem:[%s2 + $0xe8] sm:$0xff]
  %v82 = vld [vmem:[%s2 + $0xf0] sm:$0xff]
  %v83 = vld [vmem:[%s2 + $0xf8] sm:$0xff]
  %84 = vmatprep.subr.mxu0 %v53
  %85 = vmatpush1.msra.mxu0 %v52
  %86 = vmatprep.subr.mxu0 %v55
  %87 = vmatpush1.msra.mxu0 %v54
  %88 = vmatprep.subr.mxu0 %v57
  %89 = vmatpush1.msra.mxu0 %v56
  %90 = vmatprep.subr.mxu0 %v59
  %91 = vmatpush1.msra.mxu0 %v58
  %92 = vmatprep.subr.mxu0 %v61
  %93 = vmatpush1.msra.mxu0 %v60
  %94 = vmatprep.subr.mxu0 %v63
  %95 = vmatpush1.msra.mxu0 %v62
  %96 = vmatprep.subr.mxu0 %v65
  %97 = vmatpush1.msra.mxu0 %v64
  %98 = vmatprep.subr.mxu0 %v67
  %99 = vmatpush1.msra.mxu0 %v66
  %100 = vmatprep.subr.mxu0 %v69
  %101 = vmatpush1.msra.mxu0 %v68
  %102 = vmatprep.subr.mxu0 %v71
  %103 = vmatpush1.msra.mxu0 %v70
  %104 = vmatprep.subr.mxu0 %v73
  %105 = vmatpush1.msra.mxu0 %v72
  %106 = vmatprep.subr.mxu0 %v75
  %107 = vmatpush1.msra.mxu0 %v74
  %108 = vmatprep.subr.mxu0 %v77
  %109 = vmatpush1.msra.mxu0 %v76
  %110 = vmatprep.subr.mxu0 %v79
  %111 = vmatpush1.msra.mxu0 %v78
  %112 = vmatprep.subr.mxu0 %v81
  %113 = vmatpush1.msra.mxu0 %v80
  %114 = vmatprep.subr.mxu0 %v83
  %115 = vmatpush1.msra.mxu0 %v82
  %116 = vmatprep.subr.mxu0 0.0
  %117 = vmatpush1.msra.mxu0 0.0
  %118 = vmatprep.subr.mxu0 0.0
  %119 = vmatpush1.msra.mxu0 0.0
  %120 = vmatprep.subr.mxu0 0.0
  %121 = vmatpush1.msra.mxu0 0.0
  %122 = vmatprep.subr.mxu0 0.0
  %123 = vmatpush1.msra.mxu0 0.0
  %124 = vmatprep.subr.mxu0 0.0
  %125 = vmatpush1.msra.mxu0 0.0
  %126 = vmatprep.subr.mxu0 0.0
  %127 = vmatpush1.msra.mxu0 0.0
  %128 = vmatprep.subr.mxu0 0.0
  %129 = vmatpush1.msra.mxu0 0.0
  %130 = vmatprep.subr.mxu0 0.0
  %131 = vmatpush1.msra.mxu0 0.0
  %132 = vmatprep.subr.mxu0 0.0
  %133 = vmatpush1.msra.mxu0 0.0
  %134 = vmatprep.subr.mxu0 0.0
  %135 = vmatpush1.msra.mxu0 0.0
  %136 = vmatprep.subr.mxu0 0.0
  %137 = vmatpush1.msra.mxu0 0.0
  %138 = vmatprep.subr.mxu0 0.0
  %139 = vmatpush1.msra.mxu0 0.0
  %140 = vmatprep.subr.mxu0 0.0
  %141 = vmatpush1.msra.mxu0 0.0
  %142 = vmatprep.subr.mxu0 0.0
  %143 = vmatpush1.msra.mxu0 0.0
  %144 = vmatprep.subr.mxu0 0.0
  %145 = vmatpush1.msra.mxu0 0.0
  %146 = vmatprep.subr.mxu0 0.0
  %147 = vmatpush1.msra.mxu0 0.0
  %148 = vmatprep.mubr.f32.mxu0 0.0
  %149 = vmatmul.mubr.f32.gmra.mrb[0].mxu0 %v50
  %v150 = vpop.f32.mrb[0].mxu0
  %v151 = vadd.f32 0.0, %v150
  %v152 = vpop.f32.mrb[0].mxu0
  %v153 = vadd.f32 0.0, %v152
  %154 = vmatprep.mubr.f32.mxu0 0.0
  %155 = vmatmul.mubr.f32.gmra.mrb[0].mxu0 %v51
  %v156 = vpop.f32.mrb[0].mxu0
  %v157 = vadd.f32 0.0, %v156
  %v158 = vpop.f32.mrb[0].mxu0
  %v159 = vadd.f32 0.0, %v158
  %160 = vdwg.mxu0
  %v161 = vxor.u32 %v151, 2147483648
  %v162 = vxor.u32 %v157, 2147483648
  %v163 = vmul.f32 %v161, 1.442695
  %v164 = vpow.pop %v163
  %v165 = vmul.f32 %v162, 1.442695
  %v166 = vpow.pop %v165
  %v167 = vadd.f32 %v164, 1.0
  %v168 = vadd.f32 %v166, 1.0
  %v169 = vrcp.pop %v167
  %v170 = vmul.f32 1.0, %v169
  %v171 = vrcp.pop %v168
  %v172 = vmul.f32 1.0, %v171
  %v173 = vmul.f32 %v151, %v170
  %v174 = vmul.f32 %v157, %v172
  %v175 = vmul.f32 %v173, %v153
  %v176 = vmul.f32 %v174, %v159
  %v177 = vld [vmem:[#allocation3] sm:$0xff]
  %v178 = vld [vmem:[#allocation3 + $0x8] sm:$0xff]
  %v179 = vld [vmem:[%s3] sm:$0xff]
  %v180 = vld [vmem:[%s3 + $0x8] sm:$0xff]
  %v181 = vld [vmem:[%s3 + $0x10] sm:$0xff]
  %v182 = vld [vmem:[%s3 + $0x18] sm:$0xff]
  %v183 = vld [vmem:[%s3 + $0x20] sm:$0xff]
  %v184 = vld [vmem:[%s3 + $0x28] sm:$0xff]
  %v185 = vld [vmem:[%s3 + $0x30] sm:$0xff]
  %v186 = vld [vmem:[%s3 + $0x38] sm:$0xff]
  %v187 = vld [vmem:[%s3 + $0x40] sm:$0xff]
  %v188 = vld [vmem:[%s3 + $0x48] sm:$0xff]
  %v189 = vld [vmem:[%s3 + $0x50] sm:$0xff]
  %v190 = vld [vmem:[%s3 + $0x58] sm:$0xff]
  %v191 = vld [vmem:[%s3 + $0x60] sm:$0xff]
  %v192 = vld [vmem:[%s3 + $0x68] sm:$0xff]
  %v193 = vld [vmem:[%s3 + $0x70] sm:$0xff]
  %v194 = vld [vmem:[%s3 + $0x78] sm:$0xff]
  %195 = vmatprep.subr.mxu0 0.0
  %196 = vmatpush1.msra.mxu0 %v179
  %197 = vmatprep.subr.mxu0 0.0
  %198 = vmatpush1.msra.mxu0 %v180
  %199 = vmatprep.subr.mxu0 0.0
  %200 = vmatpush1.msra.mxu0 %v181
  %201 = vmatprep.subr.mxu0 0.0
  %202 = vmatpush1.msra.mxu0 %v182
  %203 = vmatprep.subr.mxu0 0.0
  %204 = vmatpush1.msra.mxu0 %v183
  %205 = vmatprep.subr.mxu0 0.0
  %206 = vmatpush1.msra.mxu0 %v184
  %207 = vmatprep.subr.mxu0 0.0
  %208 = vmatpush1.msra.mxu0 %v185
  %209 = vmatprep.subr.mxu0 0.0
  %210 = vmatpush1.msra.mxu0 %v186
  %211 = vmatprep.subr.mxu0 0.0
  %212 = vmatpush1.msra.mxu0 %v187
  %213 = vmatprep.subr.mxu0 0.0
  %214 = vmatpush1.msra.mxu0 %v188
  %215 = vmatprep.subr.mxu0 0.0
  %216 = vmatpush1.msra.mxu0 %v189
  %217 = vmatprep.subr.mxu0 0.0
  %218 = vmatpush1.msra.mxu0 %v190
  %219 = vmatprep.subr.mxu0 0.0
  %220 = vmatpush1.msra.mxu0 %v191
  %221 = vmatprep.subr.mxu0 0.0
  %222 = vmatpush1.msra.mxu0 %v192
  %223 = vmatprep.subr.mxu0 0.0
  %224 = vmatpush1.msra.mxu0 %v193
  %225 = vmatprep.subr.mxu0 0.0
  %226 = vmatpush1.msra.mxu0 %v194
  %227 = vmatprep.subr.mxu0 0.0
  %228 = vmatpush1.msra.mxu0 0.0
  %229 = vmatprep.subr.mxu0 0.0
  %230 = vmatpush1.msra.mxu0 0.0
  %231 = vmatprep.subr.mxu0 0.0
  %232 = vmatpush1.msra.mxu0 0.0
  %233 = vmatprep.subr.mxu0 0.0
  %234 = vmatpush1.msra.mxu0 0.0
  %235 = vmatprep.subr.mxu0 0.0
  %236 = vmatpush1.msra.mxu0 0.0
  %237 = vmatprep.subr.mxu0 0.0
  %238 = vmatpush1.msra.mxu0 0.0
  %239 = vmatprep.subr.mxu0 0.0
  %240 = vmatpush1.msra.mxu0 0.0
  %241 = vmatprep.subr.mxu0 0.0
  %242 = vmatpush1.msra.mxu0 0.0
  %243 = vmatprep.subr.mxu0 0.0
  %244 = vmatpush1.msra.mxu0 0.0
  %245 = vmatprep.subr.mxu0 0.0
  %246 = vmatpush1.msra.mxu0 0.0
  %247 = vmatprep.subr.mxu0 0.0
  %248 = vmatpush1.msra.mxu0 0.0
  %249 = vmatprep.subr.mxu0 0.0
  %250 = vmatpush1.msra.mxu0 0.0
  %251 = vmatprep.subr.mxu0 0.0
  %252 = vmatpush1.msra.mxu0 0.0
  %253 = vmatprep.subr.mxu0 0.0
  %254 = vmatpush1.msra.mxu0 0.0
  %255 = vmatprep.subr.mxu0 0.0
  %256 = vmatpush1.msra.mxu0 0.0
  %257 = vmatprep.subr.mxu0 0.0
  %258 = vmatpush1.msra.mxu0 0.0
  %259 = vmatprep.mubr.f32.mxu0 0.0
  %260 = vmatmul.mubr.f32.gmra.mrb[0].mxu0 %v175
  %v261 = vpop.f32.mrb[0].mxu0
  %v262 = vadd.f32 0.0, %v261
  %v263 = vpop.f32.mrb[0].mxu0
  %264 = vmatprep.mubr.f32.mxu0 0.0
  %265 = vmatmul.mubr.f32.gmra.mrb[0].mxu0 %v176
  %v266 = vpop.f32.mrb[0].mxu0
  %v267 = vadd.f32 0.0, %v266
  %v268 = vpop.f32.mrb[0].mxu0
  %269 = vdwg.mxu0
  %v270 = vadd.f32 %v177, %v262
  %v271 = vadd.f32 %v178, %v267
  %272 = vst [vmem:[#allocation3] sm:$0xff] %v270
  %273 = vst [vmem:[#allocation3 + $0x8] sm:$0xff] %v271
  // Predicated region
  $region22: #{ffn_block_pallas.1} parent=0 // pred_check
    %p274 = pneg %p17
  $region23: #{ffn_block_pallas.1} parent=0 // pred_check_branch
    %276 = sbr.rel (%p274) target = $region25
  $region24: #{ffn_block_pallas.1} parent=0 // pred_region
    %v277 = vld [vmem:[#allocation3] sm:$0xff]
    %v278 = vld [vmem:[#allocation3 + $0x8] sm:$0xff]
    %279 = vst [vmem:[%s4] sm:$0xff] %v277
    %280 = vst [vmem:[%s4 + $0x8] sm:$0xff] %v278
  $region25: #{ffn_block_pallas.1} parent=0 // pred_fallthru
    _
  // Predicated region
  $region26: #{ffn_block_pallas.1} parent=0 // pred_check
    _
  $region27: #{ffn_block_pallas.1} parent=0 // pred_check_branch
    %282 = sbr.rel (0) target = $region29
  $region28: #{ffn_block_pallas.1} parent=0 // pred_region
    _
  $region29: #{ffn_block_pallas.1} parent=0 // pred_fallthru
    _
  // Predicated region
  $region30: #{ffn_block_pallas.1} parent=0 // pred_check
    _
  $region31: #{ffn_block_pallas.1} parent=0 // pred_check_branch
    %284 = sbr.rel (0) target = $region33
  $region32: #{ffn_block_pallas.1} parent=0 // pred_region
    _
  $region33: #{ffn_block_pallas.1} parent=0 // pred_fallthru
    _

</llo_original>
